<compile_context>
chip_gen: v7x
topology: tpu7x:2x2x1
jax: 0.10.0
libtpu: 0.0.40
codegen_flags: <defaults>
</compile_context>

<pallas_src>
import jax
import jax.numpy as jnp
import numpy as np
from jax.experimental import pallas as pl
from jax.experimental.pallas import tpu as pltpu

_VMEM_LIMIT = 32 * 1024 * 1024


def _round_up(x, m):
    return (x + m - 1) // m * m


def _row_tile(r):
    for t in (512, 256, 128, 64, 32, 16, 8):
        if r % t == 0:
            return t
    return r


# ---------------------------------------------------------------------------
# 1) ConvTranspose2d(k=2, s=2) == a single matmul: every output pixel
#    (2i+di, 2j+dj) depends on exactly one input pixel (i, j).
#    Output is computed transposed, (4*Cout, M), so the lane axis is the big
#    M = N*H*W dimension (dense vst) and M is tiled for pipelining.
# ---------------------------------------------------------------------------
def _upsample_kernel(x_ref, w_ref, b_ref, o_ref):
    # x_ref: (tm, Cin)   w_ref: (4*Cout, Cin)   b_ref: (4*Cout, 1)
    # o_ref: (4*Cout, tm)
    o_ref[...] = jax.lax.dot_general(
        w_ref[...], x_ref[...],
        dimension_numbers=(((1,), (1,)), ((), ())),
        preferred_element_type=jnp.float32,
    ) + b_ref[...]


def conv_transpose_2x2_s2(x, w_t, b):
    """x: (N,H,W,Cin), w_t: (Cin,Cout,2,2) torch layout, b: (Cout,)."""
    N, H, W, Cin = x.shape
    Cout = w_t.shape[1]
    M = N * H * W
    tm = min(512, _round_up(M, 128))
    Mp = _round_up(M, tm)

    # rows ordered (di, dj, cout) with cout fastest
    w2t = jnp.transpose(w_t, (2, 3, 1, 0)).reshape(4 * Cout, Cin)
    b4 = jnp.tile(b, 4).reshape(4 * Cout, 1)
    x2 = x.reshape(M, Cin)
    if Mp != M:
        x2 = jnp.pad(x2, ((0, Mp - M), (0, 0)))

    y_t = pl.pallas_call(
        _upsample_kernel,
        out_shape=jax.ShapeDtypeStruct((4 * Cout, Mp), jnp.float32),
        grid=(Mp // tm,),
        in_specs=[
            pl.BlockSpec((tm, Cin), lambda i: (i, 0)),
            pl.BlockSpec((4 * Cout, Cin), lambda i: (0, 0)),
            pl.BlockSpec((4 * Cout, 1), lambda i: (0, 0)),
        ],
        out_specs=pl.BlockSpec((4 * Cout, tm), lambda i: (0, i)),
        compiler_params=pltpu.CompilerParams(
            dimension_semantics=("parallel",),
            vmem_limit_bytes=_VMEM_LIMIT),
    )(x2, w2t, b4)

    # Interleave (di, dj) into the spatial grid: a single fused XLA transpose
    # (the surrounding reshapes are free views of the contiguous buffer).
    y = y_t[:, :M].reshape(2, 2, Cout, N, H, W)
    y = jnp.transpose(y, (3, 4, 0, 5, 1, 2))          # (N, H, di, W, dj, Cout)
    return y.reshape(N, 2 * H, 2 * W, Cout)


# ---------------------------------------------------------------------------
# 2) Fused 3x3 "same" conv kernel (no conv bias -- it cancels in the
#    following BatchNorm).  Optionally applies the *previous* BatchNorm +
#    ReLU on the fly to its input slab, and always emits per-image channel
#    sum / sum-of-squares so the *next* BatchNorm never re-reads the
#    activation from HBM.
# ---------------------------------------------------------------------------
def _make_conv3x3_kernel(H, W, Cin, Cout, fuse_bn_relu):
    def compute(x, w, o_ref, sum_ref, ssq_ref, scale=None, shift=None):
        # x: (H+2, W+2, Cin) zero-padded slab.
        if fuse_bn_relu:
            # BN1-apply + ReLU fused into the input path; re-zero the halo
            # (affine+relu would otherwise turn the zero padding into
            # relu(shift)).
            x = jnp.maximum(x * scale + shift, 0.0)
            hi = jax.lax.broadcasted_iota(jnp.int32, (H + 2, W + 2, Cin), 0)
            wi = jax.lax.broadcasted_iota(jnp.int32, (H + 2, W + 2, Cin), 1)
            interior = (hi >= 1) & (hi <= H) & (wi >= 1) & (wi <= W)
            x = jnp.where(interior, x, 0.0)

        acc = jnp.zeros((H * W, Cout), jnp.float32)
        # TODO(synk): merge the 9 taps into one K=9*Cin im2col matmul once the
        # channel count is lane-aligned (>=128); at Cin=4 an unaligned lane-dim
        # concatenate costs more than the extra MXU pushes.
        for di in range(3):
            for dj in range(3):
                xs = x[di:di + H, dj:dj + W, :].reshape(H * W, Cin)
                acc = acc + jnp.dot(xs, w[di, dj],
                                    preferred_element_type=jnp.float32)

        o_ref[...] = acc.reshape(1, H, W, Cout)
        sum_ref[...] = jnp.sum(acc, axis=0, keepdims=True).reshape(1, 1, Cout)
        ssq_ref[...] = jnp.sum(acc * acc, axis=0,
                               keepdims=True).reshape(1, 1, Cout)

    if fuse_bn_relu:
        def kernel(x_ref, s_ref, t_ref, w_ref, o_ref, sum_ref, ssq_ref):
            compute(x_ref[0], w_ref[...], o_ref, sum_ref, ssq_ref,
                    scale=s_ref[...], shift=t_ref[...])
    else:
        def kernel(x_ref, w_ref, o_ref, sum_ref, ssq_ref):
            compute(x_ref[0], w_ref[...], o_ref, sum_ref, ssq_ref)
    return kernel


def conv3x3_bn_stats(x, w_torch, in_scale=None, in_shift=None):
    """3x3 same conv on NHWC input.  Returns (conv_out, sum_nc, sumsq_nc)."""
    N, H, W, Cin = x.shape
    Cout = w_torch.shape[0]
    w = jnp.transpose(w_torch, (2, 3, 1, 0))           # HWIO (3,3,Cin,Cout)
    xp = jnp.pad(x, ((0, 0), (1, 1), (1, 1), (0, 0)))  # zero halo (XLA pad)
    fuse = in_scale is not None

    kernel = _make_conv3x3_kernel(H, W, Cin, Cout, fuse)
    in_specs = [pl.BlockSpec((1, H + 2, W + 2, Cin), lambda n: (n, 0, 0, 0))]
    args = [xp]
    if fuse:
        in_specs += [pl.BlockSpec((1, 1, Cin), lambda n: (0, 0, 0)),
                     pl.BlockSpec((1, 1, Cin), lambda n: (0, 0, 0))]
        args += [in_scale.reshape(1, 1, Cin), in_shift.reshape(1, 1, Cin)]
    in_specs += [pl.BlockSpec((3, 3, Cin, Cout), lambda n: (0, 0, 0, 0))]
    args += [w]

    out, s, q = pl.pallas_call(
        kernel,
        out_shape=(
            jax.ShapeDtypeStruct((N, H, W, Cout), jnp.float32),
            jax.ShapeDtypeStruct((N, 1, Cout), jnp.float32),
            jax.ShapeDtypeStruct((N, 1, Cout), jnp.float32),
        ),
        grid=(N,),
        in_specs=in_specs,
        out_specs=(
            pl.BlockSpec((1, H, W, Cout), lambda n: (n, 0, 0, 0)),
            pl.BlockSpec((1, 1, Cout), lambda n: (n, 0, 0)),
            pl.BlockSpec((1, 1, Cout), lambda n: (n, 0, 0)),
        ),
        compiler_params=pltpu.CompilerParams(
            dimension_semantics=("parallel",),
            vmem_limit_bytes=_VMEM_LIMIT),
    )(*args)
    return out, s, q


# ---------------------------------------------------------------------------
# 3) Tiny (C,)-sized BatchNorm fold (glue) + lane-dense fused BN-apply + ReLU.
# ---------------------------------------------------------------------------
def _bn_fold(sum_nc, ssq_nc, count, gamma, beta, eps=1e-5):
    s = jnp.sum(sum_nc, axis=(0, 1))
    q = jnp.sum(ssq_nc, axis=(0, 1))
    mean = s / count
    var = q / count - mean * mean           # biased variance (training-mode BN)
    scale = gamma / jnp.sqrt(var + eps)
    shift = beta - mean * scale
    return scale, shift


def _bn_relu_kernel(x_ref, s_ref, t_ref, o_ref):
    o_ref[...] = jnp.maximum(x_ref[...] * s_ref[...] + t_ref[...], 0.0)


def bn_relu_apply(x, scale, shift):
    # Lane-dense view: fold W*C into the lane axis, tile rows for pipelining.
    N, H, W, C = x.shape
    R, L = N * H, W * C
    tr = _row_tile(R)
    x2 = x.reshape(R, L)                    # free view of the contiguous buffer
    s2 = jnp.tile(scale, W).reshape(1, L)
    t2 = jnp.tile(shift, W).reshape(1, L)
    y2 = pl.pallas_call(
        _bn_relu_kernel,
        out_shape=jax.ShapeDtypeStruct((R, L), jnp.float32),
        grid=(R // tr,),
        in_specs=[
            pl.BlockSpec((tr, L), lambda i: (i, 0)),
            pl.BlockSpec((1, L), lambda i: (0, 0)),
            pl.BlockSpec((1, L), lambda i: (0, 0)),
        ],
        out_specs=pl.BlockSpec((tr, L), lambda i: (i, 0)),
        compiler_params=pltpu.CompilerParams(
            dimension_semantics=("parallel",),
            vmem_limit_bytes=_VMEM_LIMIT),
    )(x2, s2, t2)
    return y2.reshape(N, H, W, C)


# ---------------------------------------------------------------------------
# DecoderBlock forward
# ---------------------------------------------------------------------------
def decoder_block(x, p, eps=1e-5):
    N, H, W, _ = x.shape
    H2, W2 = 2 * H, 2 * W
    count = N * H2 * W2

    y = conv_transpose_2x2_s2(x, p["up_w"], p["up_b"])        # (N,H2,W2,C)

    # conv1 (+ BN1 stats fused into the kernel); conv1 bias intentionally
    # unused: a per-channel bias cancels exactly in the following BatchNorm.
    c1, s1, q1 = conv3x3_bn_stats(y, p["c1_w"])
    scale1, shift1 = _bn_fold(s1, q1, count, p["bn1_g"], p["bn1_b"], eps)

    # conv2 with BN1-apply + ReLU fused into its input path (+ BN2 stats);
    # conv2 bias likewise dropped.
    c2, s2, q2 = conv3x3_bn_stats(c1, p["c2_w"], scale1, shift1)
    scale2, shift2 = _bn_fold(s2, q2, count, p["bn2_g"], p["bn2_b"], eps)

    # final BN2-apply + ReLU.
    return bn_relu_apply(c2, scale2, shift2)


# ---------------------------------------------------------------------------
# Pure-JAX reference (same semantics as the PyTorch module, NHWC layout,
# includes the conv biases -- validating that dropping them before BN is exact)
# ---------------------------------------------------------------------------
def ref_decoder_block(x, p, eps=1e-5):
    N, H, W, _ = x.shape
    Cout = p["up_b"].shape[0]
    y = jnp.einsum("nijc,cokl->nijklo", x, p["up_w"])          # (N,H,W,2,2,Cout)
    y = jnp.transpose(y, (0, 1, 3, 2, 4, 5)).reshape(N, 2 * H, 2 * W, Cout)
    y = y + p["up_b"]

    def conv_bn_relu(z, w_t, b, g, be):
        w_hwio = jnp.transpose(w_t, (2, 3, 1, 0))
        z = jax.lax.conv_general_dilated(
            z, w_hwio, (1, 1), "SAME",
            dimension_numbers=("NHWC", "HWIO", "NHWC")) + b
        m = jnp.mean(z, axis=(0, 1, 2))
        v = jnp.mean((z - m) ** 2, axis=(0, 1, 2))
        z = g * (z - m) / jnp.sqrt(v + eps) + be
        return jnp.maximum(z, 0.0)

    y = conv_bn_relu(y, p["c1_w"], p["c1_b"], p["bn1_g"], p["bn1_b"])
    y = conv_bn_relu(y, p["c2_w"], p["c2_b"], p["bn2_g"], p["bn2_b"])
    return y


if __name__ == "__main__":
    N, H, W = 2, 8, 8
    c_in, c_out = 8, 4        # channels_into_upconv=8, channels_out=4

    keys = jax.random.split(jax.random.PRNGKey(0), 9)
    params = {
        "up_w": 0.1 * jax.random.normal(keys[0], (c_in, c_out, 2, 2), jnp.float32),
        "up_b": 0.1 * jax.random.normal(keys[1], (c_out,), jnp.float32),
        "c1_w": 0.1 * jax.random.normal(keys[2], (c_out, c_out, 3, 3), jnp.float32),
        "c1_b": 0.1 * jax.random.normal(keys[3], (c_out,), jnp.float32),
        "bn1_g": 1.0 + 0.1 * jax.random.normal(keys[4], (c_out,), jnp.float32),
        "bn1_b": 0.1 * jax.random.normal(keys[5], (c_out,), jnp.float32),
        "c2_w": 0.1 * jax.random.normal(keys[6], (c_out, c_out, 3, 3), jnp.float32),
        "c2_b": 0.1 * jax.random.normal(keys[7], (c_out,), jnp.float32),
        "bn2_g": jnp.ones((c_out,), jnp.float32),
        "bn2_b": jnp.zeros((c_out,), jnp.float32),
    }

    x = jax.random.normal(keys[8], (N, H, W, c_in), jnp.float32)

    out = jax.block_until_ready(decoder_block(x, params))
    assert out.shape == (N, 2 * H, 2 * W, c_out)

    ref = jax.block_until_ready(ref_decoder_block(x, params))
    np.testing.assert_allclose(np.asarray(out), np.asarray(ref),
                               atol=1e-4, rtol=1e-4)
    print("KERNEL_OK")
</pallas_src>

<mosaic_0001>
module attributes {stable_mosaic.version = 11 : i64} {
  func.func @_upsample_kernel(%arg0: i32, %arg1: memref<128x8xf32, #tpu.memory_space<vmem>>, %arg2: memref<16x8xf32, #tpu.memory_space<vmem>>, %arg3: memref<16x1xf32, #tpu.memory_space<vmem>>, %arg4: memref<16x128xf32, #tpu.memory_space<vmem>>) attributes {dimension_semantics = [#tpu.dimension_semantics<parallel>], iteration_bounds = array<i64: 1>, scalar_prefetch = 0 : i64, scratch_operands = 0 : i64, tpu.core_type = #tpu.core_type<tc>, window_params = [{transform_indices = @transform_0, window_bounds = array<i64: 128, 8>}, {pipeline_mode = #tpu.pipeline_mode<synchronous>, transform_indices = @transform_1, window_bounds = array<i64: 16, 8>}, {pipeline_mode = #tpu.pipeline_mode<synchronous>, transform_indices = @transform_2, window_bounds = array<i64: 16, 1>}, {transform_indices = @transform_3, window_bounds = array<i64: 16, 128>}]} {
    %c0 = arith.constant 0 : index
    %c0_0 = arith.constant 0 : index
    %0 = vector.load %arg2[%c0, %c0_0] : memref<16x8xf32, #tpu.memory_space<vmem>>, vector<16x8xf32>
    %c0_1 = arith.constant 0 : index
    %c0_2 = arith.constant 0 : index
    %1 = vector.load %arg1[%c0_1, %c0_2] : memref<128x8xf32, #tpu.memory_space<vmem>>, vector<128x8xf32>
    %cst = arith.constant dense<0.000000e+00> : vector<16x128xf32>
    %2 = tpu.matmul %0, %1, %cst {dimension_numbers = #tpu.dot_dimension_numbers<[1], [1], [0], [0], [0, 0, 1, 0], [], []>} : vector<16x8xf32>, vector<128x8xf32>, vector<16x128xf32> -> vector<16x128xf32>
    %c0_3 = arith.constant 0 : index
    %c0_4 = arith.constant 0 : index
    %3 = vector.load %arg3[%c0_3, %c0_4] : memref<16x1xf32, #tpu.memory_space<vmem>>, vector<16x1xf32>
    %4 = vector.broadcast %3 : vector<16x1xf32> to vector<16x128xf32>
    %5 = arith.addf %2, %4 : vector<16x128xf32>
    %c0_5 = arith.constant 0 : index
    %c0_6 = arith.constant 0 : index
    %6 = vector.load %arg4[%c0_5, %c0_6] : memref<16x128xf32, #tpu.memory_space<vmem>>, vector<16x128xf32>
    tpu.vector_store %arg4[%c0_5, %c0_6], %5 {strides = array<i32>} : memref<16x128xf32, #tpu.memory_space<vmem>>, vector<16x128xf32>,
    return
  }
  func.func @transform_0(%arg0: i32) -> (i32, i32) {
    %c0_i32 = arith.constant 0 : i32
    %c0_i32_0 = arith.constant 0 : i32
    return %arg0, %c0_i32 : i32, i32
  }
  func.func @transform_1(%arg0: i32) -> (i32, i32) {
    %c0_i32 = arith.constant 0 : i32
    %c0_i32_0 = arith.constant 0 : i32
    %c0_i32_1 = arith.constant 0 : i32
    return %c0_i32, %c0_i32_0 : i32, i32
  }
  func.func @transform_2(%arg0: i32) -> (i32, i32) {
    %c0_i32 = arith.constant 0 : i32
    %c0_i32_0 = arith.constant 0 : i32
    %c0_i32_1 = arith.constant 0 : i32
    return %c0_i32, %c0_i32_0 : i32, i32
  }
  func.func @transform_3(%arg0: i32) -> (i32, i32) {
    %c0_i32 = arith.constant 0 : i32
    %c0_i32_0 = arith.constant 0 : i32
    return %c0_i32, %arg0 : i32, i32
  }
}

</mosaic_0001>

<llo_original>
// kernel: tpu_custom_call.1
$region0: #{tpu_custom_call.1}
  #allocation0 [shape = 'u32[]', space=smem, size = 0x4, offset = 0x4, fixed_abs, tag = 'smem constant byte address 0x4 - core index']
  #allocation1 [shape = 'u32[144,128]{1,0:T(1,128)}', space=vmem, size = 0x12000, scoped, tag = 'internal scratch']
  %s0 = inlined_call_operand.vmem [shape: f32[128,8], index: 0, kind: input, shape index: {}]
  %s1 = inlined_call_operand.vmem [shape: f32[16,8], index: 1, kind: input, shape index: {}]
  %s2 = inlined_call_operand.vmem [shape: f32[16,1], index: 2, kind: input, shape index: {}]
  %s3 = inlined_call_operand.hbm [shape: f32[16,128], index: 3, kind: output, shape index: {}]
  %s4 = sld [smem:[#allocation0]]
  $region22: #{tpu_custom_call.1} parent=0
    _
  %s6 = ssub.s32 1, %s4
  %s7 = scalar_select 0, %s6, %s4
  $region1: #{tpu_custom_call.1} parent=0
    #allocation2 [shape = 'u8[8192]{0}', space=vmem, size = 0x2000, scoped, tag = 'output window, operand 0, single buffered']
    #allocation3 [shape = 's32[1]{0}', space=sflag, size = 0x4, scoped, tag = 'scoped memory for tpu_custom_call.1']
    %8 = vsyncpa [#allocation3], 0
    // Predicated region
    $region2: #{tpu_custom_call.1} parent=1 // pred_check
      _
    $region3: #{tpu_custom_call.1} parent=1 // pred_check_branch
      %10 = sbr.rel (0) target = $region5
    $region4: #{tpu_custom_call.1} parent=1 // pred_region
      _
    $region5: #{tpu_custom_call.1} parent=1 // pred_fallthru
      _
    // Predicated region
    $region6: #{tpu_custom_call.1} parent=1 // pred_check
      _
    $region7: #{tpu_custom_call.1} parent=1 // pred_check_branch
      %12 = sbr.rel (0) target = $region9
    $region8: #{tpu_custom_call.1} parent=1 // pred_region
      _
    $region9: #{tpu_custom_call.1} parent=1 // pred_fallthru
      _
    // Predicated region
    $region10: #{tpu_custom_call.1} parent=1 // pred_check
      _
    $region11: #{tpu_custom_call.1} parent=1 // pred_check_branch
      %14 = sbr.rel (0) target = $region13
    $region12: #{tpu_custom_call.1} parent=1 // pred_region
      _
    $region13: #{tpu_custom_call.1} parent=1 // pred_fallthru
      _
    %v15 = vld [vmem:[%s1] sm:$0xff]
    %v16 = vld [vmem:[%s1 + $0x8] sm:$0xff]
    %v17 = vld [vmem:[%s0] sm:$0xff]
    %v18 = vld [vmem:[%s0 + $0x8] sm:$0xff]
    %v19 = vld [vmem:[%s0 + $0x10] sm:$0xff]
    %v20 = vld [vmem:[%s0 + $0x18] sm:$0xff]
    %v21 = vld [vmem:[%s0 + $0x20] sm:$0xff]
    %v22 = vld [vmem:[%s0 + $0x28] sm:$0xff]
    %v23 = vld [vmem:[%s0 + $0x30] sm:$0xff]
    %v24 = vld [vmem:[%s0 + $0x38] sm:$0xff]
    %v25 = vld [vmem:[%s0 + $0x40] sm:$0xff]
    %v26 = vld [vmem:[%s0 + $0x48] sm:$0xff]
    %v27 = vld [vmem:[%s0 + $0x50] sm:$0xff]
    %v28 = vld [vmem:[%s0 + $0x58] sm:$0xff]
    %v29 = vld [vmem:[%s0 + $0x60] sm:$0xff]
    %v30 = vld [vmem:[%s0 + $0x68] sm:$0xff]
    %v31 = vld [vmem:[%s0 + $0x70] sm:$0xff]
    %v32 = vld [vmem:[%s0 + $0x78] sm:$0xff]
    %v33 = vld [vmem:[%s2] sm:$0xff]
    %v34 = vld [vmem:[%s2 + $0x8] sm:$0xff]
    %36 = vset.pattern.permute.xlu0 0
    %37 = vperm.xlu0 %36, %v33
    %v38 = vpop.permute.xlu0 %37
    %41 = vset.pattern.permute.xlu0 0
    %42 = vperm.xlu0 %41, %v34
    %v43 = vpop.permute.xlu0 %42
    %vm45 = vcmask 64512
    %v47 = vsel %vm45, %v15, 0
    %v50 = vsel %vm45, %v16, 0
    %v53 = vsel %vm45, %v17, 0
    %v56 = vsel %vm45, %v18, 0
    %v59 = vsel %vm45, %v19, 0
    %v62 = vsel %vm45, %v20, 0
    %v65 = vsel %vm45, %v21, 0
    %v68 = vsel %vm45, %v22, 0
    %v71 = vsel %vm45, %v23, 0
    %v74 = vsel %vm45, %v24, 0
    %v77 = vsel %vm45, %v25, 0
    %v80 = vsel %vm45, %v26, 0
    %v83 = vsel %vm45, %v27, 0
    %v86 = vsel %vm45, %v28, 0
    %v89 = vsel %vm45, %v29, 0
    %v92 = vsel %vm45, %v30, 0
    %v95 = vsel %vm45, %v31, 0
    %v98 = vsel %vm45, %v32, 0
    %100 = vmatprep.subr.mxu0 0.0
    %101 = vmatpush1.xpose.msra.mxu0 %v53
    %102 = vmatprep.subr.mxu0 0.0
    %103 = vmatpush1.xpose.msra.mxu0 %v56
    %104 = vmatprep.subr.mxu0 0.0
    %105 = vmatpush1.xpose.msra.mxu0 %v59
    %106 = vmatprep.subr.mxu0 0.0
    %107 = vmatpush1.xpose.msra.mxu0 %v62
    %108 = vmatprep.subr.mxu0 0.0
    %109 = vmatpush1.xpose.msra.mxu0 %v65
    %110 = vmatprep.subr.mxu0 0.0
    %111 = vmatpush1.xpose.msra.mxu0 %v68
    %112 = vmatprep.subr.mxu0 0.0
    %113 = vmatpush1.xpose.msra.mxu0 %v71
    %114 = vmatprep.subr.mxu0 0.0
    %115 = vmatpush1.xpose.msra.mxu0 %v74
    %116 = vmatprep.subr.mxu0 0.0
    %117 = vmatpush1.xpose.msra.mxu0 %v77
    %118 = vmatprep.subr.mxu0 0.0
    %119 = vmatpush1.xpose.msra.mxu0 %v80
    %120 = vmatprep.subr.mxu0 0.0
    %121 = vmatpush1.xpose.msra.mxu0 %v83
    %122 = vmatprep.subr.mxu0 0.0
    %123 = vmatpush1.xpose.msra.mxu0 %v86
    %124 = vmatprep.subr.mxu0 0.0
    %125 = vmatpush1.xpose.msra.mxu0 %v89
    %126 = vmatprep.subr.mxu0 0.0
    %127 = vmatpush1.xpose.msra.mxu0 %v92
    %128 = vmatprep.subr.mxu0 0.0
    %129 = vmatpush1.xpose.msra.mxu0 %v95
    %130 = vmatprep.subr.mxu0 0.0
    %131 = vmatpush1.xpose.msra.mxu0 %v98
    %132 = vmatprep.subr.mxu0 0.0
    %133 = vmatpush1.xpose.msra.mxu0 0.0
    %134 = vmatprep.subr.mxu0 0.0
    %135 = vmatpush1.xpose.msra.mxu0 0.0
    %136 = vmatprep.subr.mxu0 0.0
    %137 = vmatpush1.xpose.msra.mxu0 0.0
    %138 = vmatprep.subr.mxu0 0.0
    %139 = vmatpush1.xpose.msra.mxu0 0.0
    %140 = vmatprep.subr.mxu0 0.0
    %141 = vmatpush1.xpose.msra.mxu0 0.0
    %142 = vmatprep.subr.mxu0 0.0
    %143 = vmatpush1.xpose.msra.mxu0 0.0
    %144 = vmatprep.subr.mxu0 0.0
    %145 = vmatpush1.xpose.msra.mxu0 0.0
    %146 = vmatprep.subr.mxu0 0.0
    %147 = vmatpush1.xpose.msra.mxu0 0.0
    %148 = vmatprep.subr.mxu0 0.0
    %149 = vmatpush1.xpose.msra.mxu0 0.0
    %150 = vmatprep.subr.mxu0 0.0
    %151 = vmatpush1.xpose.msra.mxu0 0.0
    %152 = vmatprep.subr.mxu0 0.0
    %153 = vmatpush1.xpose.msra.mxu0 0.0
    %154 = vmatprep.subr.mxu0 0.0
    %155 = vmatpush1.xpose.msra.mxu0 0.0
    %156 = vmatprep.subr.mxu0 0.0
    %157 = vmatpush1.xpose.msra.mxu0 0.0
    %158 = vmatprep.subr.mxu0 0.0
    %159 = vmatpush1.xpose.msra.mxu0 0.0
    %160 = vmatprep.subr.mxu0 0.0
    %161 = vmatpush1.xpose.msra.mxu0 0.0
    %162 = vmatprep.subr.mxu0 0.0
    %163 = vmatpush1.xpose.msra.mxu0 0.0
    %164 = vmatprep.mubr.f32.mxu0 0.0
    %165 = vmatmul.mubr.f32.gmra.mrb[0].mxu0 %v47
    %v166 = vpop.f32.mrb[0].mxu0
    %v167 = vadd.f32 %v38, %v166
    %v168 = vpop.f32.mrb[0].mxu0
    %169 = vmatprep.mubr.f32.mxu0 0.0
    %170 = vmatmul.mubr.f32.gmra.mrb[0].mxu0 %v50
    %v171 = vpop.f32.mrb[0].mxu0
    %v172 = vadd.f32 %v43, %v171
    %v173 = vpop.f32.mrb[0].mxu0
    %174 = vdwg.mxu0
    %175 = vst [vmem:[#allocation2] sm:$0xff] %v167
    %176 = vst [vmem:[#allocation2 + $0x8] sm:$0xff] %v172
    // Predicated region
    $region14: #{tpu_custom_call.1} parent=1 // pred_check
      _
    $region15: #{tpu_custom_call.1} parent=1 // pred_check_branch
      %178 = sbr.rel (0) target = $region17
    $region16: #{tpu_custom_call.1} parent=1 // pred_region
      %s180 = ssub.s32 256, 256
      %181 = vsyncadd [#allocation3], %s180
      %s182 = sshll.u32 [#allocation2], 4
      %s183 = int_to_ptr.vmem [resolvable:$true] %s182
      %188 = dma.vmem_to_hbm [thread:$0]  %s183, 256, %s3, [#allocation3], 128, 128, 8
    $region17: #{tpu_custom_call.1} parent=1 // pred_fallthru
      _
    // Predicated region
    $region18: #{tpu_custom_call.1} parent=1 // pred_check
      _
    $region19: #{tpu_custom_call.1} parent=1 // pred_check_branch
      %190 = sbr.rel (0) target = $region21
    $region20: #{tpu_custom_call.1} parent=1 // pred_region
      %191 = dma.done [#allocation3], 256
    $region21: #{tpu_custom_call.1} parent=1 // pred_fallthru
      _
    %192 = vsyncpa [#allocation3], 1

</llo_original>
